<compile_context>
chip_gen: v6e
topology: v6e:2x2x1
jax: 0.10.0
libtpu: 0.0.40
codegen_flags: <defaults>
</compile_context>

<pallas_src>
import functools

import jax
import jax.numpy as jnp
from jax import lax
from jax.experimental import pallas as pl
from jax.experimental.pallas import tpu as pltpu

PATCH = 4
IN_CH = 3
EMBED = 96
K = IN_CH * PATCH * PATCH  # 48
LN_EPS = 1e-5


def _round_up(x: int, m: int) -> int:
    return ((x + m - 1) // m) * m


def _patch_embed_ln_kernel(x_ref, w_ref, p_ref, o_ref):
    # x_ref: (tm, 48)   w_ref: (48, 96)
    # p_ref: (3, 96) = [conv_bias; ln_gamma; ln_beta]   o_ref: (tm, 96)
    y = jnp.dot(x_ref[...], w_ref[...], preferred_element_type=jnp.float32)
    y = y + p_ref[0:1, :]

    # One-pass LayerNorm statistics: var = E[y^2] - mu^2  (single VPU sweep).
    inv_n = 1.0 / EMBED
    mu = jnp.sum(y, axis=-1, keepdims=True) * inv_n
    ex2 = jnp.sum(y * y, axis=-1, keepdims=True) * inv_n
    var = ex2 - mu * mu
    inv = lax.rsqrt(var + LN_EPS)                      # EUP slot, ~free

    o_ref[...] = ((y - mu) * (inv * p_ref[1:2, :]) + p_ref[2:3, :]).astype(o_ref.dtype)


@functools.partial(jax.jit, static_argnames=("tm", "out_dtype"))
def patch_partition(x, conv_w, conv_b, ln_gamma, ln_beta, *, tm=1024, out_dtype=None):
    """x: [B, 3, H, W] -> [B, (H/4)*(W/4), 96].

    tm: row tile (multiple of 8). Clamped for tiny problems; M is padded so any
    tile divides the grid. out_dtype lets callers request bf16 output to halve
    the dominant (output) HBM traffic; math stays f32 either way.
    """
    B, C, H, W = x.shape
    assert C == IN_CH and H % PATCH == 0 and W % PATCH == 0
    Hp, Wp = H // PATCH, W // PATCH
    L = Hp * Wp
    M = B * L
    out_dtype = x.dtype if out_dtype is None else out_dtype

    tm_eff = max(8, min(tm, _round_up(M, 8)))
    M_pad = _round_up(M, tm_eff)

    # ---- glue: extract non-overlapping 4x4 patches, last axis ordered (c, kh, kw)
    # to match the reshaped conv weight.  allow_input_fusion below lets XLA fuse
    # this transpose into the pallas_call's input path instead of materializing
    # the [M, 48] array in HBM.
    xp = x.reshape(B, C, Hp, PATCH, Wp, PATCH)
    xp = jnp.transpose(xp, (0, 2, 4, 1, 3, 5))          # [B, Hp, Wp, C, kh, kw]
    patches = xp.reshape(M, K).astype(jnp.float32)      # [M, 48]
    if M_pad != M:
        patches = jnp.pad(patches, ((0, M_pad - M), (0, 0)))

    # conv weight [96, 3, 4, 4] -> [48, 96] with matching (c, kh, kw) ordering.
    w2d = conv_w.reshape(EMBED, K).T.astype(jnp.float32)                  # [48, 96]
    params = jnp.stack([conv_b, ln_gamma, ln_beta]).astype(jnp.float32)   # [3, 96]

    cost = pl.CostEstimate(
        flops=2 * M_pad * K * EMBED,
        transcendentals=M_pad,                                  # one rsqrt per row
        bytes_accessed=(M_pad * (K + EMBED) + K * EMBED + 3 * EMBED) * 4,
    )

    out = pl.pallas_call(
        _patch_embed_ln_kernel,
        out_shape=jax.ShapeDtypeStruct((M_pad, EMBED), out_dtype),
        grid_spec=pltpu.PrefetchScalarGridSpec(
            num_scalar_prefetch=0,
            grid=(M_pad // tm_eff,),
            in_specs=[
                pl.BlockSpec((tm_eff, K), lambda i: (i, 0)),
                pl.BlockSpec((K, EMBED), lambda i: (0, 0)),
                pl.BlockSpec((3, EMBED), lambda i: (0, 0)),
            ],
            out_specs=pl.BlockSpec((tm_eff, EMBED), lambda i: (i, 0)),
        ),
        compiler_params=pltpu.CompilerParams(
            dimension_semantics=("parallel",),
            allow_input_fusion=[True, False, False],
        ),
        cost_estimate=cost,
    )(patches, w2d, params)

    return out[:M].reshape(B, L, EMBED)


def _reference(x, conv_w, conv_b, ln_gamma, ln_beta):
    # Pure-JAX reference matching the PyTorch forward exactly.
    y = lax.conv_general_dilated(
        x, conv_w, window_strides=(PATCH, PATCH), padding="VALID",
        dimension_numbers=("NCHW", "OIHW", "NCHW"))
    y = y + conv_b.reshape(1, EMBED, 1, 1)
    B = y.shape[0]
    y = y.reshape(B, EMBED, -1).transpose(0, 2, 1)      # [B, L, 96]
    mu = jnp.mean(y, axis=-1, keepdims=True)
    var = jnp.mean((y - mu) ** 2, axis=-1, keepdims=True)
    return (y - mu) / jnp.sqrt(var + LN_EPS) * ln_gamma + ln_beta


if __name__ == "__main__":
    key = jax.random.PRNGKey(0)
    k_x, k_w, k_b = jax.random.split(key, 3)

    B, H, W = 2, 16, 16
    x = jax.random.normal(k_x, (B, IN_CH, H, W), dtype=jnp.float32)

    # Deterministic synthetic parameters (shapes per nn.Conv2d / nn.LayerNorm).
    fan_in = IN_CH * PATCH * PATCH
    bound = 1.0 / (fan_in ** 0.5)
    conv_w = jax.random.uniform(k_w, (EMBED, IN_CH, PATCH, PATCH),
                                minval=-bound, maxval=bound, dtype=jnp.float32)
    conv_b = jax.random.uniform(k_b, (EMBED,), minval=-bound, maxval=bound,
                                dtype=jnp.float32)
    ln_gamma = jnp.ones((EMBED,), jnp.float32)
    ln_beta = jnp.zeros((EMBED,), jnp.float32)

    out = patch_partition(x, conv_w, conv_b, ln_gamma, ln_beta)
    out = jax.block_until_ready(out)

    ref = _reference(x, conv_w, conv_b, ln_gamma, ln_beta)
    assert out.shape == (B, (H // PATCH) * (W // PATCH), EMBED)
    assert jnp.allclose(out, ref, atol=1e-4, rtol=1e-4), \
        float(jnp.max(jnp.abs(out - ref)))

    print("KERNEL_OK")
</pallas_src>

<mosaic_0001>
module attributes {stable_mosaic.version = 11 : i64} {
  func.func @_patch_embed_ln_kernel(%arg0: i32, %arg1: memref<32x48xf32, #tpu.memory_space<vmem>>, %arg2: memref<48x96xf32, #tpu.memory_space<vmem>>, %arg3: memref<3x96xf32, #tpu.memory_space<vmem>>, %arg4: memref<32x96xf32, #tpu.memory_space<vmem>>) attributes {dimension_semantics = [#tpu.dimension_semantics<parallel>], iteration_bounds = array<i64: 1>, scalar_prefetch = 0 : i64, scratch_operands = 0 : i64, tpu.core_type = #tpu.core_type<tc>, window_params = [{transform_indices = @transform_0, window_bounds = array<i64: 32, 48>}, {pipeline_mode = #tpu.pipeline_mode<synchronous>, transform_indices = @transform_1, window_bounds = array<i64: 48, 96>}, {pipeline_mode = #tpu.pipeline_mode<synchronous>, transform_indices = @transform_2, window_bounds = array<i64: 3, 96>}, {transform_indices = @transform_3, window_bounds = array<i64: 32, 96>}]} {
    %c0 = arith.constant 0 : index
    %c0_0 = arith.constant 0 : index
    %0 = vector.load %arg1[%c0, %c0_0] : memref<32x48xf32, #tpu.memory_space<vmem>>, vector<32x48xf32>
    %c0_1 = arith.constant 0 : index
    %c0_2 = arith.constant 0 : index
    %1 = vector.load %arg2[%c0_1, %c0_2] : memref<48x96xf32, #tpu.memory_space<vmem>>, vector<48x96xf32>
    %cst = arith.constant dense<0.000000e+00> : vector<32x96xf32>
    %2 = tpu.matmul %0, %1, %cst {dimension_numbers = #tpu.dot_dimension_numbers<[1], [0], [0], [1], [0, 0, 1, 1], [], []>} : vector<32x48xf32>, vector<48x96xf32>, vector<32x96xf32> -> vector<32x96xf32>
    %c0_3 = arith.constant 0 : index
    %c0_4 = arith.constant 0 : index
    %3 = vector.load %arg3[%c0_3, %c0_4] : memref<3x96xf32, #tpu.memory_space<vmem>>, vector<1x96xf32>
    %4 = vector.broadcast %3 : vector<1x96xf32> to vector<32x96xf32>
    %5 = arith.addf %2, %4 : vector<32x96xf32>
    %cst_5 = arith.constant dense<0.000000e+00> : vector<32xf32>
    %6 = vector.multi_reduction <add>, %5, %cst_5 [1] : vector<32x96xf32> to vector<32xf32>
    %7 = vector.shape_cast %6 : vector<32xf32> to vector<32x1xf32>
    %cst_6 = arith.constant 0.010416667 : f32
    %8 = vector.broadcast %cst_6 : f32 to vector<32x1xf32>
    %9 = arith.mulf %7, %8 : vector<32x1xf32>
    %10 = arith.mulf %5, %5 : vector<32x96xf32>
    %cst_7 = arith.constant dense<0.000000e+00> : vector<32xf32>
    %11 = vector.multi_reduction <add>, %10, %cst_7 [1] : vector<32x96xf32> to vector<32xf32>
    %12 = vector.shape_cast %11 : vector<32xf32> to vector<32x1xf32>
    %cst_8 = arith.constant 0.010416667 : f32
    %13 = vector.broadcast %cst_8 : f32 to vector<32x1xf32>
    %14 = arith.mulf %12, %13 : vector<32x1xf32>
    %15 = arith.mulf %9, %9 : vector<32x1xf32>
    %16 = arith.subf %14, %15 : vector<32x1xf32>
    %cst_9 = arith.constant 9.99999974E-6 : f32
    %17 = vector.broadcast %cst_9 : f32 to vector<32x1xf32>
    %18 = arith.addf %16, %17 : vector<32x1xf32>
    %19 = math.rsqrt %18 : vector<32x1xf32>
    %20 = vector.broadcast %9 : vector<32x1xf32> to vector<32x96xf32>
    %21 = arith.subf %5, %20 : vector<32x96xf32>
    %c1 = arith.constant 1 : index
    %c0_10 = arith.constant 0 : index
    %22 = vector.load %arg3[%c1, %c0_10] : memref<3x96xf32, #tpu.memory_space<vmem>>, vector<1x96xf32>
    %23 = vector.broadcast %19 : vector<32x1xf32> to vector<32x96xf32>
    %24 = vector.broadcast %22 : vector<1x96xf32> to vector<32x96xf32>
    %25 = arith.mulf %23, %24 : vector<32x96xf32>
    %26 = arith.mulf %21, %25 : vector<32x96xf32>
    %c2 = arith.constant 2 : index
    %c0_11 = arith.constant 0 : index
    %27 = vector.load %arg3[%c2, %c0_11] : memref<3x96xf32, #tpu.memory_space<vmem>>, vector<1x96xf32>
    %28 = vector.broadcast %27 : vector<1x96xf32> to vector<32x96xf32>
    %29 = arith.addf %26, %28 : vector<32x96xf32>
    %c0_12 = arith.constant 0 : index
    %c0_13 = arith.constant 0 : index
    %30 = vector.load %arg4[%c0_12, %c0_13] : memref<32x96xf32, #tpu.memory_space<vmem>>, vector<32x96xf32>
    tpu.vector_store %arg4[%c0_12, %c0_13], %29 {strides = array<i32>} : memref<32x96xf32, #tpu.memory_space<vmem>>, vector<32x96xf32>,
    return
  }
  func.func @transform_0(%arg0: i32) -> (i32, i32) {
    %c0_i32 = arith.constant 0 : i32
    %c0_i32_0 = arith.constant 0 : i32
    return %arg0, %c0_i32 : i32, i32
  }
  func.func @transform_1(%arg0: i32) -> (i32, i32) {
    %c0_i32 = arith.constant 0 : i32
    %c0_i32_0 = arith.constant 0 : i32
    %c0_i32_1 = arith.constant 0 : i32
    return %c0_i32, %c0_i32_0 : i32, i32
  }
  func.func @transform_2(%arg0: i32) -> (i32, i32) {
    %c0_i32 = arith.constant 0 : i32
    %c0_i32_0 = arith.constant 0 : i32
    %c0_i32_1 = arith.constant 0 : i32
    return %c0_i32, %c0_i32_0 : i32, i32
  }
  func.func @transform_3(%arg0: i32) -> (i32, i32) {
    %c0_i32 = arith.constant 0 : i32
    %c0_i32_0 = arith.constant 0 : i32
    return %arg0, %c0_i32 : i32, i32
  }
}

</mosaic_0001>

<llo_original>
// kernel: patch_partition.1
$region0: #{patch_partition.1}
  #allocation0 [shape = 'u32[]', space=smem, size = 0x4, offset = 0x4, fixed_abs, tag = 'smem constant byte address 0x4 - core index']
  #allocation1 [shape = 'u32[144,128]{1,0:T(1,128)}', space=vmem, size = 0x12000, scoped, tag = 'internal scratch']
  %s0 = inlined_call_operand.vmem [shape: f32[32,48], index: 0, kind: input, shape index: {}]
  %s1 = inlined_call_operand.vmem [shape: f32[48,96], index: 1, kind: input, shape index: {}]
  %s2 = inlined_call_operand.vmem [shape: f32[3,96], index: 2, kind: input, shape index: {}]
  %s3 = inlined_call_operand.hbm [shape: f32[32,96], index: 3, kind: output, shape index: {}]
  %s4 = sld [smem:[#allocation0]]
  $region22: #{patch_partition.1} parent=0
    _
  %s6 = ssub.s32 1, %s4
  %s7 = scalar_select 0, %s6, %s4
  $region1: #{patch_partition.1} parent=0
    #allocation2 [shape = 'u8[16384]{0}', space=vmem, size = 0x4000, scoped, tag = 'output window, operand 0, single buffered']
    #allocation3 [shape = 's32[1]{0}', space=sflag, size = 0x4, scoped, tag = 'scoped memory for patch_partition.1']
    %8 = vsyncpa [#allocation3], 0
    // Predicated region
    $region2: #{patch_partition.1} parent=1 // pred_check
      _
    $region3: #{patch_partition.1} parent=1 // pred_check_branch
      %10 = sbr.rel (0) target = $region5
    $region4: #{patch_partition.1} parent=1 // pred_region
      _
    $region5: #{patch_partition.1} parent=1 // pred_fallthru
      _
    // Predicated region
    $region6: #{patch_partition.1} parent=1 // pred_check
      _
    $region7: #{patch_partition.1} parent=1 // pred_check_branch
      %12 = sbr.rel (0) target = $region9
    $region8: #{patch_partition.1} parent=1 // pred_region
      _
    $region9: #{patch_partition.1} parent=1 // pred_fallthru
      _
    // Predicated region
    $region10: #{patch_partition.1} parent=1 // pred_check
      _
    $region11: #{patch_partition.1} parent=1 // pred_check_branch
      %14 = sbr.rel (0) target = $region13
    $region12: #{patch_partition.1} parent=1 // pred_region
      _
    $region13: #{patch_partition.1} parent=1 // pred_fallthru
      _
    %v15 = vld [vmem:[%s0] sm:$0xff]
    %v16 = vld [vmem:[%s0 + $0x8] sm:$0xff]
    %v17 = vld [vmem:[%s0 + $0x10] sm:$0xff]
    %v18 = vld [vmem:[%s0 + $0x18] sm:$0xff]
    %v19 = vld [vmem:[%s1] sm:$0xff]
    %v20 = vld [vmem:[%s1 + $0x8] sm:$0xff]
    %v21 = vld [vmem:[%s1 + $0x10] sm:$0xff]
    %v22 = vld [vmem:[%s1 + $0x18] sm:$0xff]
    %v23 = vld [vmem:[%s1 + $0x20] sm:$0xff]
    %v24 = vld [vmem:[%s1 + $0x28] sm:$0xff]
    %v25 = vld [vmem:[%s2] sm:$0x1]
    %v26 = vlaneseq
    %v27 = vshrl.u32 %v26, 7
    %v28 = vsub.s32 0, %v27
    %v29 = vrot.slane %v25, %v28
    %vm30 = vcmask 392192
    %v32 = vsel %vm30, %v15, 0
    %v35 = vsel %vm30, %v16, 0
    %v38 = vsel %vm30, %v17, 0
    %v41 = vsel %vm30, %v18, 0
    %43 = vmatprep.subr.mxu0 0.0
    %44 = vmatpush1.msra.mxu0 0.0
    %45 = vmatprep.subr.mxu0 0.0
    %46 = vmatpush1.msra.mxu0 0.0
    %47 = vmatprep.subr.mxu0 0.0
    %48 = vmatpush1.msra.mxu0 0.0
    %49 = vmatprep.subr.mxu0 0.0
    %50 = vmatpush1.msra.mxu0 0.0
    %51 = vmatprep.subr.mxu0 0.0
    %52 = vmatpush1.msra.mxu0 0.0
    %53 = vmatprep.subr.mxu0 0.0
    %54 = vmatpush1.msra.mxu0 0.0
    %55 = vmatprep.subr.mxu0 0.0
    %56 = vmatpush1.msra.mxu0 0.0
    %57 = vmatprep.subr.mxu0 0.0
    %58 = vmatpush1.msra.mxu0 0.0
    %59 = vmatprep.subr.mxu0 0.0
    %60 = vmatpush1.msra.mxu0 0.0
    %61 = vmatprep.subr.mxu0 0.0
    %62 = vmatpush1.msra.mxu0 0.0
    %63 = vmatprep.subr.mxu0 0.0
    %64 = vmatpush1.msra.mxu0 %v24
    %65 = vmatprep.subr.mxu0 0.0
    %66 = vmatpush1.msra.mxu0 %v23
    %67 = vmatprep.subr.mxu0 0.0
    %68 = vmatpush1.msra.mxu0 %v22
    %69 = vmatprep.subr.mxu0 0.0
    %70 = vmatpush1.msra.mxu0 %v21
    %71 = vmatprep.subr.mxu0 0.0
    %72 = vmatpush1.msra.mxu0 %v20
    %73 = vmatprep.subr.mxu0 0.0
    %74 = vmatpush1.msra.mxu0 %v19
    %75 = vmatprep.subr.mxu0 0.0
    %76 = vmatpush2.msra.mxu0 0.0
    %77 = vmatprep.subr.mxu0 0.0
    %78 = vmatpush2.msra.mxu0 0.0
    %79 = vmatprep.subr.mxu0 0.0
    %80 = vmatpush2.msra.mxu0 0.0
    %81 = vmatprep.subr.mxu0 0.0
    %82 = vmatpush2.msra.mxu0 0.0
    %83 = vmatprep.subr.mxu0 0.0
    %84 = vmatpush2.msra.mxu0 0.0
    %85 = vmatprep.subr.mxu0 0.0
    %86 = vmatpush2.msra.mxu0 0.0
    %87 = vmatprep.subr.mxu0 0.0
    %88 = vmatpush2.msra.mxu0 0.0
    %89 = vmatprep.subr.mxu0 0.0
    %90 = vmatpush2.msra.mxu0 0.0
    %91 = vmatprep.subr.mxu0 0.0
    %92 = vmatpush2.msra.mxu0 0.0
    %93 = vmatprep.subr.mxu0 0.0
    %94 = vmatpush2.msra.mxu0 0.0
    %95 = vmatprep.subr.mxu0 0.0
    %96 = vmatpush2.msra.mxu0 0.0
    %97 = vmatprep.subr.mxu0 0.0
    %98 = vmatpush2.msra.mxu0 0.0
    %99 = vmatprep.subr.mxu0 0.0
    %100 = vmatpush2.msra.mxu0 0.0
    %101 = vmatprep.subr.mxu0 0.0
    %102 = vmatpush2.msra.mxu0 0.0
    %103 = vmatprep.subr.mxu0 0.0
    %104 = vmatpush2.msra.mxu0 0.0
    %105 = vmatprep.subr.mxu0 0.0
    %106 = vmatpush2.msra.mxu0 0.0
    %107 = vmatprep.mubr.f32.mxu0 0.0
    %108 = vmatmul.mubr.f32.gmra.mxu0 %v32
    %v109 = vpop.f32.mrf.mxu0
    %v110 = vadd.f32 %v29, %v109
    %v111 = vpop.f32.mrf.mxu0
    %112 = vmatprep.mubr.f32.mxu0 0.0
    %113 = vmatmul.mubr.f32.gmra.mxu0 %v35
    %v114 = vpop.f32.mrf.mxu0
    %v115 = vadd.f32 %v29, %v114
    %v116 = vpop.f32.mrf.mxu0
    %117 = vmatprep.mubr.f32.mxu0 0.0
    %118 = vmatmul.mubr.f32.gmra.mxu0 %v38
    %v119 = vpop.f32.mrf.mxu0
    %v120 = vadd.f32 %v29, %v119
    %v121 = vpop.f32.mrf.mxu0
    %122 = vmatprep.mubr.f32.mxu0 0.0
    %123 = vmatmul.mubr.f32.gmra.mxu0 %v41
    %v124 = vpop.f32.mrf.mxu0
    %v125 = vadd.f32 %v29, %v124
    %v126 = vpop.f32.mrf.mxu0
    %127 = vdwg.mxu0
    %vm128 = vcmask 785408
    %v129 = vsel %vm128, %v110, 0.0
    %130 = vadd.xlane.f32.xlu0 %v129
    %v131 = vpop.xlane.xlu0 %130
    %v132 = vsel %vm128, %v115, 0.0
    %133 = vadd.xlane.f32.xlu0 %v132
    %v134 = vpop.xlane.xlu0 %133
    %v135 = vsel %vm128, %v120, 0.0
    %136 = vadd.xlane.f32.xlu0 %v135
    %v137 = vpop.xlane.xlu0 %136
    %v138 = vsel %vm128, %v125, 0.0
    %139 = vadd.xlane.f32.xlu0 %v138
    %v140 = vpop.xlane.xlu0 %139
    %v141 = vmul.f32 %v131, 0.010416667
    %v142 = vmul.f32 %v134, 0.010416667
    %v143 = vmul.f32 %v137, 0.010416667
    %v144 = vmul.f32 %v140, 0.010416667
    %v145 = vmul.f32 %v110, %v110
    %v146 = vmul.f32 %v115, %v115
    %v147 = vmul.f32 %v120, %v120
    %v148 = vmul.f32 %v125, %v125
    %v149 = vsel %vm128, %v145, 0.0
    %150 = vadd.xlane.f32.xlu0 %v149
    %v151 = vpop.xlane.xlu0 %150
    %v152 = vsel %vm128, %v146, 0.0
    %153 = vadd.xlane.f32.xlu0 %v152
    %v154 = vpop.xlane.xlu0 %153
    %v155 = vsel %vm128, %v147, 0.0
    %156 = vadd.xlane.f32.xlu0 %v155
    %v157 = vpop.xlane.xlu0 %156
    %v158 = vsel %vm128, %v148, 0.0
    %159 = vadd.xlane.f32.xlu0 %v158
    %v160 = vpop.xlane.xlu0 %159
    %v161 = vmul.f32 %v151, 0.010416667
    %v162 = vmul.f32 %v154, 0.010416667
    %v163 = vmul.f32 %v157, 0.010416667
    %v164 = vmul.f32 %v160, 0.010416667
    %v165 = vmul.f32 %v141, %v141
    %v166 = vmul.f32 %v142, %v142
    %v167 = vmul.f32 %v143, %v143
    %v168 = vmul.f32 %v144, %v144
    %v169 = vsub.f32 %v161, %v165
    %v170 = vsub.f32 %v162, %v166
    %v171 = vsub.f32 %v163, %v167
    %v172 = vsub.f32 %v164, %v168
    %v173 = vadd.f32 %v169, 1e-05
    %v174 = vadd.f32 %v170, 1e-05
    %v175 = vadd.f32 %v171, 1e-05
    %v176 = vadd.f32 %v172, 1e-05
    %v177 = vrsqrt.pop %v173
    %v178 = vrsqrt.pop %v174
    %v179 = vrsqrt.pop %v175
    %v180 = vrsqrt.pop %v176
    %v181 = vsub.f32 %v110, %v141
    %v182 = vsub.f32 %v115, %v142
    %v183 = vsub.f32 %v120, %v143
    %v184 = vsub.f32 %v125, %v144
    %v185 = vld [vmem:[%s2 + $0x1] sm:$0x1]
    %v186 = vlaneseq
    %v187 = vshrl.u32 %v186, 7
    %v188 = vsub.s32 0, %v187
    %v189 = vrot.slane %v185, %v188
    %v190 = vmul.f32 %v177, %v189
    %v191 = vmul.f32 %v178, %v189
    %v192 = vmul.f32 %v179, %v189
    %v193 = vmul.f32 %v180, %v189
    %v194 = vmul.f32 %v181, %v190
    %v195 = vmul.f32 %v182, %v191
    %v196 = vmul.f32 %v183, %v192
    %v197 = vmul.f32 %v184, %v193
    %v198 = vld [vmem:[%s2 + $0x2] sm:$0x1]
    %v199 = vlaneseq
    %v200 = vshrl.u32 %v199, 7
    %v201 = vsub.s32 0, %v200
    %v202 = vrot.slane %v198, %v201
    %v203 = vadd.f32 %v194, %v202
    %v204 = vadd.f32 %v195, %v202
    %v205 = vadd.f32 %v196, %v202
    %v206 = vadd.f32 %v197, %v202
    %207 = vst.msk [vmem:[#allocation2] sm:$0xff] %vm128, %v203
    %208 = vst.msk [vmem:[#allocation2 + $0x8] sm:$0xff] %vm128, %v204
    %209 = vst.msk [vmem:[#allocation2 + $0x10] sm:$0xff] %vm128, %v205
    %210 = vst.msk [vmem:[#allocation2 + $0x18] sm:$0xff] %vm128, %v206
    // Predicated region
    $region14: #{patch_partition.1} parent=1 // pred_check
      _
    $region15: #{patch_partition.1} parent=1 // pred_check_branch
      %212 = sbr.rel (0) target = $region17
    $region16: #{patch_partition.1} parent=1 // pred_region
      %s214 = ssub.s32 512, 512
      %215 = vsyncadd [#allocation3], %s214
      %s216 = sshll.u32 [#allocation2], 4
      %s217 = int_to_ptr.vmem [resolvable:$true] %s216
      %222 = dma.vmem_to_hbm [thread:$0]  %s217, 512, %s3, [#allocation3], 128, 128, 8
    $region17: #{patch_partition.1} parent=1 // pred_fallthru
      _
    // Predicated region
    $region18: #{patch_partition.1} parent=1 // pred_check
      _
    $region19: #{patch_partition.1} parent=1 // pred_check_branch
      %224 = sbr.rel (0) target = $region21
    $region20: #{patch_partition.1} parent=1 // pred_region
      %225 = dma.done [#allocation3], 512
    $region21: #{patch_partition.1} parent=1 // pred_fallthru
      _
    %226 = vsyncpa [#allocation3], 1

</llo_original>
